<compile_context>
chip_gen: v5e
topology: v5e:2x2
jax: 0.10.0
libtpu: 0.0.40
codegen_flags: <defaults>
</compile_context>

<pallas_src>
import functools

import numpy as np
import jax
import jax.numpy as jnp
from jax.experimental import pallas as pl
from jax.experimental.pallas import tpu as pltpu


_TARGET_ROWS = 2048   # neighbour rows per grid step (review: sweep 1024-4096)


# --------------------------------------------------------------------------------------
# Pallas kernel: per-grid-step = tile_b batches x N_pad neighbours.
#   x_ego_ref : (1, tile_b, obs*2)  f32   (one ego trajectory per batch in the tile)
#   x_nei_ref : (tile_m, obs*2)     f32   (tile_m = tile_b * N_pad neighbour rows)
#   w_enc_ref : (obs*2, obs*d_h)    bf16  (block-diagonal fold of the per-step Dense(2->d_h))
#   bias_ref  : (4, obs*d_h)        f32   (row0=encoder bias, rows1..3 = fc1/fc2/fc3 biases)
#   w1/w2/w3  : bf16 weights
#   f_re_ref  : (tile_m, d_half)    f32
# --------------------------------------------------------------------------------------
def resonance_mlp_kernel(x_ego_ref, x_nei_ref, w_enc_ref, bias_ref,
                         w1_ref, w2_ref, w3_ref, f_re_ref):
    tile_b = x_ego_ref.shape[1]
    obs2 = x_ego_ref.shape[2]
    tile_m = x_nei_ref.shape[0]
    n_per_b = tile_m // tile_b
    d_enc = w_enc_ref.shape[1]
    d_h = w1_ref.shape[1]
    d_half = w3_ref.shape[1]

    biases = bias_ref[...]
    b_enc = biases[0:1, :]
    b1 = biases[1:2, :d_h]
    b2 = biases[2:3, :d_h]
    b3 = biases[3:4, :d_half]

    w_enc = w_enc_ref[...]                                     # bf16

    def encode(x_rows):
        # x_rows: (rows, obs*2) f32, flattened (frame, coord) layout.
        # Fused "pure" anchoring: subtract the last observed frame (columns obs2-2 / obs2-1,
        # selected per coordinate parity) in f32, then cast to bf16 for the MXU.
        lane = jax.lax.broadcasted_iota(jnp.int32, x_rows.shape, 1)
        ax = x_rows[:, obs2 - 2:obs2 - 1]                      # (rows, 1) last-frame x
        ay = x_rows[:, obs2 - 1:obs2]                          # (rows, 1) last-frame y
        anchor = jnp.where(lane % 2 == 0, ax, ay)              # (rows, obs*2)
        x_pure = (x_rows - anchor).astype(jnp.bfloat16)
        f = jnp.dot(x_pure, w_enc, preferred_element_type=jnp.float32) + b_enc
        return jnp.maximum(f, 0.0)                             # (rows, obs*d_h) f32

    # Neighbour rows: one lane-dense (tile_m, 16) @ (16, obs*d_h) encoder GEMM.
    f_nei = encode(x_nei_ref[...])                             # (tile_m, d_enc)

    # Ego rows: encoded ONCE per batch (tile_b rows), then broadcast across the N_pad
    # neighbour rows of that batch (sublane-aligned: N_pad is a multiple of 8).
    f_ego_b = encode(x_ego_ref[0])                             # (tile_b, d_enc)
    f_ego = jnp.broadcast_to(
        f_ego_b[:, None, :], (tile_b, n_per_b, d_enc)).reshape(tile_m, d_enc)

    # Spectral similarity + fc1/fc2/fc3 (fc1 is one K = obs*d_h GEMM).  bf16 dot inputs,
    # f32 accumulation / bias / relu.
    f = (f_ego * f_nei).astype(jnp.bfloat16)                   # (tile_m, d_enc)
    h1 = jnp.maximum(
        jnp.dot(f, w1_ref[...], preferred_element_type=jnp.float32) + b1, 0.0)
    h2 = jnp.maximum(
        jnp.dot(h1.astype(jnp.bfloat16), w2_ref[...],
                preferred_element_type=jnp.float32) + b2, 0.0)
    f_re_ref[...] = jnp.maximum(
        jnp.dot(h2.astype(jnp.bfloat16), w3_ref[...],
                preferred_element_type=jnp.float32) + b3, 0.0)


# --------------------------------------------------------------------------------------
# Wrapper
# --------------------------------------------------------------------------------------
def _round_up(x, m):
    return ((x + m - 1) // m) * m


@functools.partial(jax.jit, static_argnames=("partitions",))
def resonance_forward(params, x_ego_2d, x_nei_2d, partitions):
    B, obs, _ = x_ego_2d.shape
    N = x_nei_2d.shape[1]
    d_h = params["w_te"].shape[1]
    d_half = params["w3"].shape[1]
    obs2 = obs * 2
    d_enc = obs * d_h

    # ---- tile geometry: tile_b whole batches per grid step ----
    n_pad = _round_up(N, 8)                         # sublane-aligned rows per batch
    tile_b = max(1, min(B, _TARGET_ROWS // n_pad))
    if B >= 2:
        tile_b = min(tile_b, (B + 1) // 2)          # >= 2 grid steps so v7x's 2 TCs both work
    b_pad = _round_up(B, tile_b)
    num_tiles = b_pad // tile_b
    tile_m = tile_b * n_pad
    m_pad = b_pad * n_pad

    # ---- inputs: no anchoring and no ego broadcast here (both fused into the kernel) ----
    x_nei_rows = jnp.pad(
        x_nei_2d, ((0, b_pad - B), (0, n_pad - N), (0, 0), (0, 0))).reshape(m_pad, obs2)
    x_ego_g = jnp.pad(
        x_ego_2d.reshape(B, obs2), ((0, b_pad - B), (0, 0))).reshape(num_tiles, tile_b, obs2)

    # ---- fold per-step Dense(2 -> d_h) into one block-diagonal (obs*2, obs*d_h) weight ----
    eye = jnp.eye(obs, dtype=jnp.float32)
    w_enc = jnp.einsum("st,cj->sctj", eye, params["w_te"]).reshape(obs2, d_enc)
    w_enc = w_enc.astype(jnp.bfloat16)
    b_enc = jnp.tile(params["b_te"][0], obs)                    # (obs*d_h,)

    # ---- pack the four bias vectors into one f32 block ----
    bias_pack = jnp.zeros((4, d_enc), jnp.float32)
    bias_pack = bias_pack.at[0, :].set(b_enc)
    bias_pack = bias_pack.at[1, :d_h].set(params["b1"][0])
    bias_pack = bias_pack.at[2, :d_h].set(params["b2"][0])
    bias_pack = bias_pack.at[3, :d_half].set(params["b3"][0])

    w1 = params["w1"].astype(jnp.bfloat16)
    w2 = params["w2"].astype(jnp.bfloat16)
    w3 = params["w3"].astype(jnp.bfloat16)

    flops = 2 * (m_pad * (obs2 * d_enc + d_enc * d_h + d_h * d_h + d_h * d_half)
                 + b_pad * obs2 * d_enc)
    bytes_accessed = (4 * (m_pad * obs2 + b_pad * obs2 + m_pad * d_half + bias_pack.size)
                      + 2 * (w_enc.size + w1.size + w2.size + w3.size))
    cost = pl.CostEstimate(flops=int(flops), transcendentals=0,
                           bytes_accessed=int(bytes_accessed))

    f_re_rows = pl.pallas_call(
        resonance_mlp_kernel,
        out_shape=jax.ShapeDtypeStruct((m_pad, d_half), jnp.float32),
        grid=(num_tiles,),
        in_specs=[
            pl.BlockSpec((1, tile_b, obs2), lambda i: (i, 0, 0)),   # ego, per-batch
            pl.BlockSpec((tile_m, obs2), lambda i: (i, 0)),         # neighbour rows
            pl.BlockSpec(w_enc.shape, lambda i: (0, 0)),            # resident weights
            pl.BlockSpec(bias_pack.shape, lambda i: (0, 0)),
            pl.BlockSpec(w1.shape, lambda i: (0, 0)),
            pl.BlockSpec(w2.shape, lambda i: (0, 0)),
            pl.BlockSpec(w3.shape, lambda i: (0, 0)),
        ],
        out_specs=pl.BlockSpec((tile_m, d_half), lambda i: (i, 0)),
        compiler_params=pltpu.CompilerParams(
            dimension_semantics=("parallel",)),
        cost_estimate=cost,
    )(x_ego_g, x_nei_rows, w_enc, bias_pack, w1, w2, w3)

    f_re = f_re_rows.reshape(b_pad, n_pad, d_half)[:B, :N]

    # ---- angle-partition pooling + circle encoding: tiny O(B*P*(N+d)), mixes neighbours
    #      within a batch, so it stays as plain-JAX einsum (per the performance review). ----
    p_nei = x_nei_2d[:, :, -1, :]                                          # (B, N, 2)
    f_distance = jnp.sqrt(jnp.sum(p_nei * p_nei, axis=-1))                 # (B, N)
    f_angle = jnp.mod(jnp.arctan2(p_nei[..., 0], p_nei[..., 1]), 2.0 * np.pi)
    idx = (f_angle / (2.0 * np.pi / partitions)).astype(jnp.int32)
    # get_mask(sum(x_nei, [-1,-2])) as in the original module (padded all-zero neighbours drop).
    final_mask = (jnp.sum(x_nei_2d, axis=(-1, -2)) != 0).astype(jnp.int32)
    idx = idx * final_mask + (-1) * (1 - final_mask)
    onehot = (idx[:, None, :] ==
              jnp.arange(partitions, dtype=jnp.int32)[None, :, None]).astype(jnp.float32)
    n = jnp.sum(onehot, axis=-1) + 1e-4                                    # (B, P)
    positions = jnp.stack(
        [jnp.sum(f_distance[:, None, :] * onehot, axis=-1) / n,
         jnp.sum(f_angle[:, None, :] * onehot, axis=-1) / n], axis=-1)     # (B, P, 2)
    re_partitions = jnp.einsum("bpn,bnd->bpd", onehot, f_re) / n[..., None]
    f_pos = jax.nn.relu(jnp.matmul(positions, params["w_ce"]) + params["b_ce"][0])
    re_matrix = jnp.concatenate([re_partitions, f_pos], axis=-1)           # (B, P, d)
    return re_matrix, f_re


# --------------------------------------------------------------------------------------
# Pure-JAX reference (mirrors the PyTorch forward, full_steps=False, identity transform)
# --------------------------------------------------------------------------------------
def resonance_reference(params, x_ego_2d, x_nei_2d, partitions):
    relu = jax.nn.relu
    hp = jax.lax.Precision.HIGHEST
    x_ego_pure = (x_ego_2d - x_ego_2d[..., -1:, :])[..., None, :, :]
    x_nei_pure = x_nei_2d - x_nei_2d[..., -1:, :]
    pack = jnp.concatenate([x_ego_pure, x_nei_pure], axis=-3)
    f_pack = relu(jnp.matmul(pack, params["w_te"], precision=hp) + params["b_te"][0])
    f = f_pack[..., :1, :, :] * f_pack[..., 1:, :, :]
    B, N = f.shape[0], f.shape[1]
    f = f.reshape(B, N, -1)
    h1 = relu(jnp.matmul(f, params["w1"], precision=hp) + params["b1"][0])
    h2 = relu(jnp.matmul(h1, params["w2"], precision=hp) + params["b2"][0])
    f_re = relu(jnp.matmul(h2, params["w3"], precision=hp) + params["b3"][0])

    p_nei = x_nei_2d[..., -1, :]
    f_distance = jnp.linalg.norm(p_nei, axis=-1)
    f_angle = jnp.mod(jnp.arctan2(p_nei[..., 0], p_nei[..., 1]), 2.0 * np.pi)
    idx = (f_angle / (2.0 * np.pi / partitions)).astype(jnp.int32)
    final_mask = (jnp.sum(x_nei_2d, axis=(-1, -2)) != 0).astype(jnp.int32)
    idx = idx * final_mask + (-1) * (1 - final_mask)

    pos_list, re_list = [], []
    for p in range(partitions):
        m = (idx == p).astype(jnp.float32)
        n = jnp.sum(m, axis=-1) + 1e-4
        pos_list.append(jnp.stack([jnp.sum(f_distance * m, -1) / n,
                                   jnp.sum(f_angle * m, -1) / n], axis=-1))
        re_list.append(jnp.sum(f_re * m[..., None], axis=-2) / n[..., None])
    positions = jnp.stack(pos_list, axis=-2)
    re_partitions = jnp.stack(re_list, axis=-2)
    f_pos = relu(jnp.matmul(positions, params["w_ce"], precision=hp) + params["b_ce"][0])
    return jnp.concatenate([re_partitions, f_pos], axis=-1), f_re


def init_params(key, obs, d_h, d_out):
    d_half = d_out // 2
    ks = jax.random.split(key, 10)
    s = 0.1
    return {
        "w_te": s * jax.random.normal(ks[0], (2, d_h), jnp.float32),
        "b_te": s * jax.random.normal(ks[1], (1, d_h), jnp.float32),
        "w1":   s * jax.random.normal(ks[2], (obs * d_h, d_h), jnp.float32),
        "b1":   s * jax.random.normal(ks[3], (1, d_h), jnp.float32),
        "w2":   s * jax.random.normal(ks[4], (d_h, d_h), jnp.float32),
        "b2":   s * jax.random.normal(ks[5], (1, d_h), jnp.float32),
        "w3":   s * jax.random.normal(ks[6], (d_h, d_half), jnp.float32),
        "b3":   s * jax.random.normal(ks[7], (1, d_half), jnp.float32),
        "w_ce": s * jax.random.normal(ks[8], (2, d_half), jnp.float32),
        "b_ce": s * jax.random.normal(ks[9], (1, d_half), jnp.float32),
    }


if __name__ == "__main__":
    B, N, OBS, D_TRAJ = 2, 8, 8, 2
    D_H, D_OUT, PARTITIONS = 32, 32, 8

    key = jax.random.PRNGKey(0)
    k1, k2 = jax.random.split(key)
    x_ego = jax.random.normal(k1, (B, OBS, D_TRAJ), jnp.float32)
    x_nei = 2.0 * jax.random.normal(k2, (B, N, OBS, D_TRAJ), jnp.float32)
    # one padded (all-zero) neighbour per batch to exercise the validity mask
    x_nei = x_nei.at[:, -1].set(0.0)

    params = init_params(jax.random.PRNGKey(42), OBS, D_H, D_OUT)

    re_matrix, f_re = resonance_forward(params, x_ego, x_nei, partitions=PARTITIONS)
    jax.block_until_ready((re_matrix, f_re))

    re_ref, fre_ref = resonance_reference(params, x_ego, x_nei, PARTITIONS)
    # Tolerances account for the bf16 MXU dot inputs (f32 accumulation) in the kernel vs the
    # f32 HIGHEST-precision reference.
    np.testing.assert_allclose(np.asarray(f_re), np.asarray(fre_ref), rtol=5e-2, atol=1e-2)
    np.testing.assert_allclose(np.asarray(re_matrix), np.asarray(re_ref), rtol=5e-2, atol=1e-2)

    assert re_matrix.shape == (B, PARTITIONS, D_OUT)
    assert f_re.shape == (B, N, D_OUT // 2)
    print("KERNEL_OK")
</pallas_src>

<mosaic_0001>
module attributes {stable_mosaic.version = 11 : i64} {
  func.func @resonance_mlp_kernel(%arg0: i32, %arg1: memref<1x1x16xf32, #tpu.memory_space<vmem>>, %arg2: memref<8x16xf32, #tpu.memory_space<vmem>>, %arg3: memref<16x256xbf16, #tpu.memory_space<vmem>>, %arg4: memref<4x256xf32, #tpu.memory_space<vmem>>, %arg5: memref<256x32xbf16, #tpu.memory_space<vmem>>, %arg6: memref<32x32xbf16, #tpu.memory_space<vmem>>, %arg7: memref<32x16xbf16, #tpu.memory_space<vmem>>, %arg8: memref<8x16xf32, #tpu.memory_space<vmem>>) attributes {dimension_semantics = [#tpu.dimension_semantics<parallel>], iteration_bounds = array<i64: 2>, scalar_prefetch = 0 : i64, scratch_operands = 0 : i64, tpu.core_type = #tpu.core_type<tc>, window_params = [{transform_indices = @transform_0, window_bounds = array<i64: 1, 1, 16>}, {transform_indices = @transform_1, window_bounds = array<i64: 8, 16>}, {pipeline_mode = #tpu.pipeline_mode<synchronous>, transform_indices = @transform_2, window_bounds = array<i64: 16, 256>}, {pipeline_mode = #tpu.pipeline_mode<synchronous>, transform_indices = @transform_3, window_bounds = array<i64: 4, 256>}, {pipeline_mode = #tpu.pipeline_mode<synchronous>, transform_indices = @transform_4, window_bounds = array<i64: 256, 32>}, {pipeline_mode = #tpu.pipeline_mode<synchronous>, transform_indices = @transform_5, window_bounds = array<i64: 32, 32>}, {pipeline_mode = #tpu.pipeline_mode<synchronous>, transform_indices = @transform_6, window_bounds = array<i64: 32, 16>}, {transform_indices = @transform_7, window_bounds = array<i64: 8, 16>}]} {
    %c0 = arith.constant 0 : index
    %c0_0 = arith.constant 0 : index
    %0 = vector.load %arg4[%c0, %c0_0] : memref<4x256xf32, #tpu.memory_space<vmem>>, vector<4x256xf32>
    %1 = vector.extract_strided_slice %0 {offsets = [0, 0], sizes = [1, 256], strides = [1, 1]} : vector<4x256xf32> to vector<1x256xf32>
    %2 = vector.extract_strided_slice %0 {offsets = [1, 0], sizes = [1, 32], strides = [1, 1]} : vector<4x256xf32> to vector<1x32xf32>
    %3 = vector.extract_strided_slice %0 {offsets = [2, 0], sizes = [1, 32], strides = [1, 1]} : vector<4x256xf32> to vector<1x32xf32>
    %4 = vector.extract_strided_slice %0 {offsets = [3, 0], sizes = [1, 16], strides = [1, 1]} : vector<4x256xf32> to vector<1x16xf32>
    %c0_1 = arith.constant 0 : index
    %c0_2 = arith.constant 0 : index
    %5 = vector.load %arg3[%c0_1, %c0_2] : memref<16x256xbf16, #tpu.memory_space<vmem>>, vector<16x256xbf16>
    %c0_3 = arith.constant 0 : index
    %c0_4 = arith.constant 0 : index
    %6 = vector.load %arg2[%c0_3, %c0_4] : memref<8x16xf32, #tpu.memory_space<vmem>>, vector<8x16xf32>
    %7 = tpu.iota {dimensions = array<i32: 1>} : vector<8x16xi32>
    %8 = vector.extract_strided_slice %6 {offsets = [0, 14], sizes = [8, 1], strides = [1, 1]} : vector<8x16xf32> to vector<8x1xf32>
    %9 = vector.extract_strided_slice %6 {offsets = [0, 15], sizes = [8, 1], strides = [1, 1]} : vector<8x16xf32> to vector<8x1xf32>
    %c2_i32 = arith.constant 2 : i32
    %c0_i32 = arith.constant 0 : i32
    %10 = arith.cmpi eq, %c2_i32, %c0_i32 : i32
    %c1_i32 = arith.constant 1 : i32
    %11 = arith.select %10, %c1_i32, %c2_i32 : i32
    %12 = vector.broadcast %11 : i32 to vector<8x16xi32>
    %13 = arith.remsi %7, %12 : vector<8x16xi32>
    %c0_i32_5 = arith.constant 0 : i32
    %14 = vector.broadcast %c0_i32_5 : i32 to vector<8x16xi32>
    %15 = arith.cmpi ne, %13, %14 : vector<8x16xi32>
    %c0_i32_6 = arith.constant 0 : i32
    %16 = vector.broadcast %c0_i32_6 : i32 to vector<8x16xi32>
    %17 = arith.cmpi slt, %13, %16 : vector<8x16xi32>
    %c0_i32_7 = arith.constant 0 : i32
    %18 = arith.cmpi slt, %11, %c0_i32_7 : i32
    %19 = vector.broadcast %18 : i1 to vector<8x16xi1>
    %20 = vector.broadcast %19 : vector<8x16xi1> to vector<8x16xi1>
    %21 = arith.xori %17, %20 : vector<8x16xi1>
    %22 = arith.andi %21, %15 : vector<8x16xi1>
    %23 = vector.broadcast %11 : i32 to vector<8x16xi32>
    %24 = arith.addi %13, %23 : vector<8x16xi32>
    %25 = arith.select %22, %24, %13 : vector<8x16xi1>, vector<8x16xi32>
    %c0_i32_8 = arith.constant 0 : i32
    %26 = vector.broadcast %c0_i32_8 : i32 to vector<8x16xi32>
    %27 = arith.cmpi eq, %25, %26 : vector<8x16xi32>
    %28 = vector.shape_cast %8 : vector<8x1xf32> to vector<8x1xf32>
    %29 = vector.broadcast %28 : vector<8x1xf32> to vector<8x16xf32>
    %30 = vector.shape_cast %9 : vector<8x1xf32> to vector<8x1xf32>
    %31 = vector.broadcast %30 : vector<8x1xf32> to vector<8x16xf32>
    %32 = arith.select %27, %29, %31 : vector<8x16xi1>, vector<8x16xf32>
    %33 = arith.subf %6, %32 : vector<8x16xf32>
    %34 = arith.truncf %33 : vector<8x16xf32> to vector<8x16xbf16>
    %cst = arith.constant dense<0.000000e+00> : vector<8x256xf32>
    %35 = tpu.matmul %34, %5, %cst {dimension_numbers = #tpu.dot_dimension_numbers<[1], [0], [0], [1], [0, 0, 1, 1], [], []>} : vector<8x16xbf16>, vector<16x256xbf16>, vector<8x256xf32> -> vector<8x256xf32>
    %36 = vector.broadcast %1 : vector<1x256xf32> to vector<8x256xf32>
    %37 = arith.addf %35, %36 : vector<8x256xf32>
    %cst_9 = arith.constant 0.000000e+00 : f32
    %38 = vector.broadcast %cst_9 : f32 to vector<8x256xf32>
    %39 = arith.maximumf %37, %38 : vector<8x256xf32>
    %c0_10 = arith.constant 0 : index
    %c0_11 = arith.constant 0 : index
    %c0_12 = arith.constant 0 : index
    %40 = vector.load %arg1[%c0_10, %c0_11, %c0_12] : memref<1x1x16xf32, #tpu.memory_space<vmem>>, vector<1x1x16xf32>
    %41 = vector.shape_cast %40 : vector<1x1x16xf32> to vector<1x16xf32>
    %42 = tpu.iota {dimensions = array<i32: 1>} : vector<1x16xi32>
    %43 = vector.extract_strided_slice %41 {offsets = [0, 14], sizes = [1, 1], strides = [1, 1]} : vector<1x16xf32> to vector<1x1xf32>
    %44 = vector.extract_strided_slice %41 {offsets = [0, 15], sizes = [1, 1], strides = [1, 1]} : vector<1x16xf32> to vector<1x1xf32>
    %c2_i32_13 = arith.constant 2 : i32
    %c0_i32_14 = arith.constant 0 : i32
    %45 = arith.cmpi eq, %c2_i32_13, %c0_i32_14 : i32
    %c1_i32_15 = arith.constant 1 : i32
    %46 = arith.select %45, %c1_i32_15, %c2_i32_13 : i32
    %47 = vector.broadcast %46 : i32 to vector<1x16xi32>
    %48 = arith.remsi %42, %47 : vector<1x16xi32>
    %c0_i32_16 = arith.constant 0 : i32
    %49 = vector.broadcast %c0_i32_16 : i32 to vector<1x16xi32>
    %50 = arith.cmpi ne, %48, %49 : vector<1x16xi32>
    %c0_i32_17 = arith.constant 0 : i32
    %51 = vector.broadcast %c0_i32_17 : i32 to vector<1x16xi32>
    %52 = arith.cmpi slt, %48, %51 : vector<1x16xi32>
    %c0_i32_18 = arith.constant 0 : i32
    %53 = arith.cmpi slt, %46, %c0_i32_18 : i32
    %54 = vector.broadcast %53 : i1 to vector<1x16xi1>
    %55 = vector.broadcast %54 : vector<1x16xi1> to vector<1x16xi1>
    %56 = arith.xori %52, %55 : vector<1x16xi1>
    %57 = arith.andi %56, %50 : vector<1x16xi1>
    %58 = vector.broadcast %46 : i32 to vector<1x16xi32>
    %59 = arith.addi %48, %58 : vector<1x16xi32>
    %60 = arith.select %57, %59, %48 : vector<1x16xi1>, vector<1x16xi32>
    %c0_i32_19 = arith.constant 0 : i32
    %61 = vector.broadcast %c0_i32_19 : i32 to vector<1x16xi32>
    %62 = arith.cmpi eq, %60, %61 : vector<1x16xi32>
    %63 = vector.shape_cast %43 : vector<1x1xf32> to vector<1x1xf32>
    %64 = vector.broadcast %63 : vector<1x1xf32> to vector<1x16xf32>
    %65 = vector.shape_cast %44 : vector<1x1xf32> to vector<1x1xf32>
    %66 = vector.broadcast %65 : vector<1x1xf32> to vector<1x16xf32>
    %67 = arith.select %62, %64, %66 : vector<1x16xi1>, vector<1x16xf32>
    %68 = arith.subf %41, %67 : vector<1x16xf32>
    %69 = arith.truncf %68 : vector<1x16xf32> to vector<1x16xbf16>
    %cst_20 = arith.constant dense<0.000000e+00> : vector<1x256xf32>
    %70 = tpu.matmul %69, %5, %cst_20 {dimension_numbers = #tpu.dot_dimension_numbers<[1], [0], [0], [1], [0, 0, 1, 1], [], []>} : vector<1x16xbf16>, vector<16x256xbf16>, vector<1x256xf32> -> vector<1x256xf32>
    %71 = arith.addf %70, %1 : vector<1x256xf32>
    %cst_21 = arith.constant 0.000000e+00 : f32
    %72 = vector.broadcast %cst_21 : f32 to vector<1x256xf32>
    %73 = arith.maximumf %71, %72 : vector<1x256xf32>
    %74 = vector.shape_cast %73 : vector<1x256xf32> to vector<1x1x256xf32>
    %75 = vector.shape_cast %74 : vector<1x1x256xf32> to vector<1x1x256xf32>
    %76 = vector.broadcast %75 : vector<1x1x256xf32> to vector<1x8x256xf32>
    %77 = vector.shape_cast %76 : vector<1x8x256xf32> to vector<8x256xf32>
    %78 = arith.mulf %77, %39 : vector<8x256xf32>
    %79 = arith.truncf %78 : vector<8x256xf32> to vector<8x256xbf16>
    %c0_22 = arith.constant 0 : index
    %c0_23 = arith.constant 0 : index
    %80 = vector.load %arg5[%c0_22, %c0_23] : memref<256x32xbf16, #tpu.memory_space<vmem>>, vector<256x32xbf16>
    %cst_24 = arith.constant dense<0.000000e+00> : vector<8x32xf32>
    %81 = tpu.matmul %79, %80, %cst_24 {dimension_numbers = #tpu.dot_dimension_numbers<[1], [0], [0], [1], [0, 0, 1, 1], [], []>} : vector<8x256xbf16>, vector<256x32xbf16>, vector<8x32xf32> -> vector<8x32xf32>
    %82 = vector.broadcast %2 : vector<1x32xf32> to vector<8x32xf32>
    %83 = arith.addf %81, %82 : vector<8x32xf32>
    %cst_25 = arith.constant 0.000000e+00 : f32
    %84 = vector.broadcast %cst_25 : f32 to vector<8x32xf32>
    %85 = arith.maximumf %83, %84 : vector<8x32xf32>
    %86 = arith.truncf %85 : vector<8x32xf32> to vector<8x32xbf16>
    %c0_26 = arith.constant 0 : index
    %c0_27 = arith.constant 0 : index
    %87 = vector.load %arg6[%c0_26, %c0_27] : memref<32x32xbf16, #tpu.memory_space<vmem>>, vector<32x32xbf16>
    %cst_28 = arith.constant dense<0.000000e+00> : vector<8x32xf32>
    %88 = tpu.matmul %86, %87, %cst_28 {dimension_numbers = #tpu.dot_dimension_numbers<[1], [0], [0], [1], [0, 0, 1, 1], [], []>} : vector<8x32xbf16>, vector<32x32xbf16>, vector<8x32xf32> -> vector<8x32xf32>
    %89 = vector.broadcast %3 : vector<1x32xf32> to vector<8x32xf32>
    %90 = arith.addf %88, %89 : vector<8x32xf32>
    %cst_29 = arith.constant 0.000000e+00 : f32
    %91 = vector.broadcast %cst_29 : f32 to vector<8x32xf32>
    %92 = arith.maximumf %90, %91 : vector<8x32xf32>
    %93 = arith.truncf %92 : vector<8x32xf32> to vector<8x32xbf16>
    %c0_30 = arith.constant 0 : index
    %c0_31 = arith.constant 0 : index
    %94 = vector.load %arg7[%c0_30, %c0_31] : memref<32x16xbf16, #tpu.memory_space<vmem>>, vector<32x16xbf16>
    %cst_32 = arith.constant dense<0.000000e+00> : vector<8x16xf32>
    %95 = tpu.matmul %93, %94, %cst_32 {dimension_numbers = #tpu.dot_dimension_numbers<[1], [0], [0], [1], [0, 0, 1, 1], [], []>} : vector<8x32xbf16>, vector<32x16xbf16>, vector<8x16xf32> -> vector<8x16xf32>
    %96 = vector.broadcast %4 : vector<1x16xf32> to vector<8x16xf32>
    %97 = arith.addf %95, %96 : vector<8x16xf32>
    %cst_33 = arith.constant 0.000000e+00 : f32
    %98 = vector.broadcast %cst_33 : f32 to vector<8x16xf32>
    %99 = arith.maximumf %97, %98 : vector<8x16xf32>
    %c0_34 = arith.constant 0 : index
    %c0_35 = arith.constant 0 : index
    %100 = vector.load %arg8[%c0_34, %c0_35] : memref<8x16xf32, #tpu.memory_space<vmem>>, vector<8x16xf32>
    tpu.vector_store %arg8[%c0_34, %c0_35], %99 {strides = array<i32>} : memref<8x16xf32, #tpu.memory_space<vmem>>, vector<8x16xf32>,
    return
  }
  func.func @transform_0(%arg0: i32) -> (i32, i32, i32) {
    %c0_i32 = arith.constant 0 : i32
    %c0_i32_0 = arith.constant 0 : i32
    %c0_i32_1 = arith.constant 0 : i32
    return %arg0, %c0_i32, %c0_i32_0 : i32, i32, i32
  }
  func.func @transform_1(%arg0: i32) -> (i32, i32) {
    %c0_i32 = arith.constant 0 : i32
    %c0_i32_0 = arith.constant 0 : i32
    return %arg0, %c0_i32 : i32, i32
  }
  func.func @transform_2(%arg0: i32) -> (i32, i32) {
    %c0_i32 = arith.constant 0 : i32
    %c0_i32_0 = arith.constant 0 : i32
    %c0_i32_1 = arith.constant 0 : i32
    return %c0_i32, %c0_i32_0 : i32, i32
  }
  func.func @transform_3(%arg0: i32) -> (i32, i32) {
    %c0_i32 = arith.constant 0 : i32
    %c0_i32_0 = arith.constant 0 : i32
    %c0_i32_1 = arith.constant 0 : i32
    return %c0_i32, %c0_i32_0 : i32, i32
  }
  func.func @transform_4(%arg0: i32) -> (i32, i32) {
    %c0_i32 = arith.constant 0 : i32
    %c0_i32_0 = arith.constant 0 : i32
    %c0_i32_1 = arith.constant 0 : i32
    return %c0_i32, %c0_i32_0 : i32, i32
  }
  func.func @transform_5(%arg0: i32) -> (i32, i32) {
    %c0_i32 = arith.constant 0 : i32
    %c0_i32_0 = arith.constant 0 : i32
    %c0_i32_1 = arith.constant 0 : i32
    return %c0_i32, %c0_i32_0 : i32, i32
  }
  func.func @transform_6(%arg0: i32) -> (i32, i32) {
    %c0_i32 = arith.constant 0 : i32
    %c0_i32_0 = arith.constant 0 : i32
    %c0_i32_1 = arith.constant 0 : i32
    return %c0_i32, %c0_i32_0 : i32, i32
  }
  func.func @transform_7(%arg0: i32) -> (i32, i32) {
    %c0_i32 = arith.constant 0 : i32
    %c0_i32_0 = arith.constant 0 : i32
    return %arg0, %c0_i32 : i32, i32
  }
}

</mosaic_0001>

<llo_original>
// kernel: tile.6
$region0: #{tile.6}
  #allocation0 [shape = 's32[1]{0}', space=sflag, size = 0x4, scoped, tag = 'scoped memory for tile.6']
  %s0 = inlined_call_operand.vmem [shape: f32[32], index: 0, kind: input, shape index: {}]
  %s1 = inlined_call_operand.vmem [shape: f32[8,32], index: 1, kind: output, shape index: {}]
  // Predicated region
  $region2: #{tile.6} parent=0 // pred_check
    _
  $region3: #{tile.6} parent=0 // pred_check_branch
    %3 = sbr.rel (0) target = $region5
  $region4: #{tile.6} parent=0 // pred_region
    _
  $region5: #{tile.6} parent=0 // pred_fallthru
    _
  %v4 = vld [vmem:[%s0] ss:$0 sm:$0xff]
  %5 = vst [vmem:[%s1] sm:$0xff] %v4

// kernel: resonance_forward.1
$region0: #{resonance_forward.1}
  #allocation0 [shape = 'u32[]', space=smem, size = 0x4, offset = 0x4, fixed_abs, tag = 'smem constant byte address 0x4 - core index']
  #allocation1 [shape = 'u32[72,128]{1,0:T(1,128)}', space=vmem, size = 0x9000, scoped, tag = 'internal scratch']
  %s0 = inlined_call_operand.vmem [shape: f32[2,1,16], index: 0, kind: input, shape index: {}]
  %s1 = inlined_call_operand.vmem [shape: f32[16,16], index: 1, kind: input, shape index: {}]
  %s2 = inlined_call_operand.vmem [shape: bf16[16,256], index: 2, kind: input, shape index: {}]
  %s3 = inlined_call_operand.vmem [shape: f32[4,256], index: 3, kind: input, shape index: {}]
  %s4 = inlined_call_operand.vmem [shape: bf16[256,32], index: 4, kind: input, shape index: {}]
  %s5 = inlined_call_operand.vmem [shape: bf16[32,32], index: 5, kind: input, shape index: {}]
  %s6 = inlined_call_operand.vmem [shape: bf16[32,16], index: 6, kind: input, shape index: {}]
  %s7 = inlined_call_operand.vmem [shape: f32[16,16], index: 7, kind: output, shape index: {}]
  %s8 = sld [smem:[#allocation0]]
  $region61: #{resonance_forward.1} parent=0
    _
  %s10 = ssub.s32 1, %s8
  %s11 = scalar_select 0, %s10, %s8
  loop: start=0, step=1, limit=4
  $region2: #{resonance_forward.1} parent=0 // loop_pre_header
    _
  $region3: #{resonance_forward.1} parent=0 // loop_header
    %s13 = sphi 0, %s17
    %p14 = scmp.ge.s32.totalorder %s13, 4
    %s23 = sphi 0, %s25
    %s26 = sphi 0, %s23
    %s27 = sphi 0, %s26
    %s43 = sphi 0, %s27
    %s49 = sphi 0, %s51
    %s52 = sphi 0, %s49
    %s53 = sphi 0, %s52
    %s69 = sphi 0, %s53
    %s73 = sphi 0, %s73
    %s75 = sphi 0, %s73
    %s76 = sphi 0, %s75
    %s90 = sphi 0, %s76
    %s94 = sphi 0, %s94
    %s96 = sphi 0, %s94
    %s97 = sphi 0, %s96
    %s111 = sphi 0, %s97
    %s115 = sphi 0, %s115
    %s117 = sphi 0, %s115
    %s118 = sphi 0, %s117
    %s132 = sphi 0, %s118
    %s136 = sphi 0, %s136
    %s138 = sphi 0, %s136
    %s139 = sphi 0, %s138
    %s153 = sphi 0, %s139
    %s157 = sphi 0, %s157
    %s159 = sphi 0, %s157
    %s160 = sphi 0, %s159
    %s174 = sphi 0, %s160
    %s180 = sphi 0, %s182
    %s183 = sphi 0, %s180
    %s184 = sphi 0, %s183
    %s200 = sphi 0, %s184
  $region4: #{resonance_forward.1} parent=0 // loop_header_branch
    %16 = sbr.rel (%p14) target = $region8
  $region5: #{resonance_forward.1} parent=0 // loop_body
    %s18 = ssub.s32 %s13, 1
    %s19 = ssub.s32 %s13, 2
    %s20 = sadd.s32 %s13, 1
    %s21 = ssub.s32 %s13, %s20
    %p22 = scmp.eq.s32.totalorder %s21, 0
    %s24 = sadd.s32 %s23, 1
    %s25 = scalar_select %p22, %s23, %s24
    %p28 = pneg %p22
    %p29 = scmp.eq.s32.totalorder %s13, 1
    %p30 = por %p28, %p29
    %p31 = scmp.ne.s32.totalorder %s23, %s26
    %p32 = scmp.eq.s32.totalorder %s13, 0
    %p33 = por %p31, %p32
    %p34 = scmp.ne.s32.totalorder %s23, %s26
    %p35 = scmp.eq.s32.totalorder %s18, 1
    %p36 = por %p34, %p35
    %p37 = scmp.ne.s32.totalorder %s26, %s27
    %p38 = scmp.eq.s32.totalorder %s18, 0
    %p39 = por %p37, %p38
    %p40 = scmp.ne.s32.totalorder %s26, %s27
    %p41 = scmp.eq.s32.totalorder %s19, 1
    %p42 = por %p40, %p41
    %p44 = scmp.ne.s32.totalorder %s27, %s43
    %p45 = scmp.eq.s32.totalorder %s19, 0
    %p46 = por %p44, %p45
    %s47 = ssub.s32 %s13, %s20
    %p48 = scmp.eq.s32.totalorder %s47, 0
    %s50 = sadd.s32 %s49, 1
    %s51 = scalar_select %p48, %s49, %s50
    %p54 = pneg %p48
    %p55 = scmp.eq.s32.totalorder %s13, 1
    %p56 = por %p54, %p55
    %p57 = scmp.ne.s32.totalorder %s49, %s52
    %p58 = scmp.eq.s32.totalorder %s13, 0
    %p59 = por %p57, %p58
    %p60 = scmp.ne.s32.totalorder %s49, %s52
    %p61 = scmp.eq.s32.totalorder %s18, 1
    %p62 = por %p60, %p61
    %p63 = scmp.ne.s32.totalorder %s52, %s53
    %p64 = scmp.eq.s32.totalorder %s18, 0
    %p65 = por %p63, %p64
    %p66 = scmp.ne.s32.totalorder %s52, %s53
    %p67 = scmp.eq.s32.totalorder %s19, 1
    %p68 = por %p66, %p67
    %p70 = scmp.ne.s32.totalorder %s53, %s69
    %p71 = scmp.eq.s32.totalorder %s19, 0
    %p72 = por %p70, %p71
    %s74 = sadd.s32 %s73, 1
    %p77 = scmp.eq.s32.totalorder %s13, 1
    %p78 = scmp.ne.s32.totalorder %s73, %s75
    %p79 = scmp.eq.s32.totalorder %s13, 0
    %p80 = por %p78, %p79
    %p81 = scmp.ne.s32.totalorder %s73, %s75
    %p82 = scmp.eq.s32.totalorder %s18, 1
    %p83 = por %p81, %p82
    %p84 = scmp.ne.s32.totalorder %s75, %s76
    %p85 = scmp.eq.s32.totalorder %s18, 0
    %p86 = por %p84, %p85
    %p87 = scmp.ne.s32.totalorder %s75, %s76
    %p88 = scmp.eq.s32.totalorder %s19, 1
    %p89 = por %p87, %p88
    %p91 = scmp.ne.s32.totalorder %s76, %s90
    %p92 = scmp.eq.s32.totalorder %s19, 0
    %p93 = por %p91, %p92
    %s95 = sadd.s32 %s94, 1
    %p98 = scmp.eq.s32.totalorder %s13, 1
    %p99 = scmp.ne.s32.totalorder %s94, %s96
    %p100 = scmp.eq.s32.totalorder %s13, 0
    %p101 = por %p99, %p100
    %p102 = scmp.ne.s32.totalorder %s94, %s96
    %p103 = scmp.eq.s32.totalorder %s18, 1
    %p104 = por %p102, %p103
    %p105 = scmp.ne.s32.totalorder %s96, %s97
    %p106 = scmp.eq.s32.totalorder %s18, 0
    %p107 = por %p105, %p106
    %p108 = scmp.ne.s32.totalorder %s96, %s97
    %p109 = scmp.eq.s32.totalorder %s19, 1
    %p110 = por %p108, %p109
    %p112 = scmp.ne.s32.totalorder %s97, %s111
    %p113 = scmp.eq.s32.totalorder %s19, 0
    %p114 = por %p112, %p113
    %s116 = sadd.s32 %s115, 1
    %p119 = scmp.eq.s32.totalorder %s13, 1
    %p120 = scmp.ne.s32.totalorder %s115, %s117
    %p121 = scmp.eq.s32.totalorder %s13, 0
    %p122 = por %p120, %p121
    %p123 = scmp.ne.s32.totalorder %s115, %s117
    %p124 = scmp.eq.s32.totalorder %s18, 1
    %p125 = por %p123, %p124
    %p126 = scmp.ne.s32.totalorder %s117, %s118
    %p127 = scmp.eq.s32.totalorder %s18, 0
    %p128 = por %p126, %p127
    %p129 = scmp.ne.s32.totalorder %s117, %s118
    %p130 = scmp.eq.s32.totalorder %s19, 1
    %p131 = por %p129, %p130
    %p133 = scmp.ne.s32.totalorder %s118, %s132
    %p134 = scmp.eq.s32.totalorder %s19, 0
    %p135 = por %p133, %p134
    %s137 = sadd.s32 %s136, 1
    %p140 = scmp.eq.s32.totalorder %s13, 1
    %p141 = scmp.ne.s32.totalorder %s136, %s138
    %p142 = scmp.eq.s32.totalorder %s13, 0
    %p143 = por %p141, %p142
    %p144 = scmp.ne.s32.totalorder %s136, %s138
    %p145 = scmp.eq.s32.totalorder %s18, 1
    %p146 = por %p144, %p145
    %p147 = scmp.ne.s32.totalorder %s138, %s139
    %p148 = scmp.eq.s32.totalorder %s18, 0
    %p149 = por %p147, %p148
    %p150 = scmp.ne.s32.totalorder %s138, %s139
    %p151 = scmp.eq.s32.totalorder %s19, 1
    %p152 = por %p150, %p151
    %p154 = scmp.ne.s32.totalorder %s139, %s153
    %p155 = scmp.eq.s32.totalorder %s19, 0
    %p156 = por %p154, %p155
    %s158 = sadd.s32 %s157, 1
    %p161 = scmp.eq.s32.totalorder %s13, 1
    %p162 = scmp.ne.s32.totalorder %s157, %s159
    %p163 = scmp.eq.s32.totalorder %s13, 0
    %p164 = por %p162, %p163
    %p165 = scmp.ne.s32.totalorder %s157, %s159
    %p166 = scmp.eq.s32.totalorder %s18, 1
    %p167 = por %p165, %p166
    %p168 = scmp.ne.s32.totalorder %s159, %s160
    %p169 = scmp.eq.s32.totalorder %s18, 0
    %p170 = por %p168, %p169
    %p171 = scmp.ne.s32.totalorder %s159, %s160
    %p172 = scmp.eq.s32.totalorder %s19, 1
    %p173 = por %p171, %p172
    %p175 = scmp.ne.s32.totalorder %s160, %s174
    %p176 = scmp.eq.s32.totalorder %s19, 0
    %p177 = por %p175, %p176
    %s178 = ssub.s32 %s13, %s20
    %p179 = scmp.eq.s32.totalorder %s178, 0
    %s181 = sadd.s32 %s180, 1
    %s182 = scalar_select %p179, %s180, %s181
    %p185 = pneg %p179
    %p186 = scmp.eq.s32.totalorder %s13, 1
    %p187 = por %p185, %p186
    %p188 = scmp.ne.s32.totalorder %s180, %s183
    %p189 = scmp.eq.s32.totalorder %s13, 0
    %p190 = por %p188, %p189
    %p191 = scmp.ne.s32.totalorder %s180, %s183
    %p192 = scmp.eq.s32.totalorder %s18, 1
    %p193 = por %p191, %p192
    %p194 = scmp.ne.s32.totalorder %s183, %s184
    %p195 = scmp.eq.s32.totalorder %s18, 0
    %p196 = por %p194, %p195
    %p197 = scmp.ne.s32.totalorder %s183, %s184
    %p198 = scmp.eq.s32.totalorder %s19, 1
    %p199 = por %p197, %p198
    %p201 = scmp.ne.s32.totalorder %s184, %s200
    %p202 = scmp.eq.s32.totalorder %s19, 0
    %p203 = por %p201, %p202
    %p204 = scmp.le.s32.totalorder 1, %s13
    %p205 = scmp.lt.s32.totalorder %s13, 3
    %p206 = pnand %p204, %p205
    %p207 = pneg %p206
    // Predicated region
    $region9: #{resonance_forward.1} parent=5 // pred_check
      _
    $region10: #{resonance_forward.1} parent=5 // pred_check_branch
      %209 = sbr.rel (%p206) target = $region12
    $region11: #{resonance_forward.1} parent=5 // pred_region
      %s210 = ssub.s32 %s13, 1
      // Predicated region
      $region13: #{resonance_forward.1} parent=11 // pred_check
        %p211 = pneg %p86
      $region14: #{resonance_forward.1} parent=11 // pred_check_branch
        %213 = sbr.rel (%p211) target = $region16
      $region15: #{resonance_forward.1} parent=11 // pred_region
        _
      $region16: #{resonance_forward.1} parent=11 // pred_fallthru
        _
      // Predicated region
      $region17: #{resonance_forward.1} parent=11 // pred_check
        %p214 = pneg %p107
      $region18: #{resonance_forward.1} parent=11 // pred_check_branch
        %216 = sbr.rel (%p214) target = $region20
      $region19: #{resonance_forward.1} parent=11 // pred_region
        _
      $region20: #{resonance_forward.1} parent=11 // pred_fallthru
        _
      // Predicated region
      $region21: #{resonance_forward.1} parent=11 // pred_check
        %p217 = pneg %p128
      $region22: #{resonance_forward.1} parent=11 // pred_check_branch
        %219 = sbr.rel (%p217) target = $region24
      $region23: #{resonance_forward.1} parent=11 // pred_region
        _
      $region24: #{resonance_forward.1} parent=11 // pred_fallthru
        _
      // Predicated region
      $region25: #{resonance_forward.1} parent=11 // pred_check
        %p220 = pneg %p149
      $region26: #{resonance_forward.1} parent=11 // pred_check_branch
        %222 = sbr.rel (%p220) target = $region28
      $region27: #{resonance_forward.1} parent=11 // pred_region
        _
      $region28: #{resonance_forward.1} parent=11 // pred_fallthru
        _
      // Predicated region
      $region29: #{resonance_forward.1} parent=11 // pred_check
        %p223 = pneg %p170
      $region30: #{resonance_forward.1} parent=11 // pred_check_branch
        %225 = sbr.rel (%p223) target = $region32
      $region31: #{resonance_forward.1} parent=11 // pred_region
        _
      $region32: #{resonance_forward.1} parent=11 // pred_fallthru
        _
    $region12: #{resonance_forward.1} parent=5 // pred_fallthru
      _
    %p226 = scmp.lt.s32.totalorder %s13, 2
    // Predicated region
    $region33: #{resonance_forward.1} parent=5 // pred_check
      %p227 = pneg %p226
    $region34: #{resonance_forward.1} parent=5 // pred_check_branch
      %229 = sbr.rel (%p227) target = $region36
    $region35: #{resonance_forward.1} parent=5 // pred_region
      // Predicated region
      $region37: #{resonance_forward.1} parent=35 // pred_check
        %p230 = pneg %p33
      $region38: #{resonance_forward.1} parent=35 // pred_check_branch
        %232 = sbr.rel (%p230) target = $region40
      $region39: #{resonance_forward.1} parent=35 // pred_region
        %p233 = scmp.lt.s32.totalorder %s13, 1
        %s234 = scalar_select %p233, %s13, 1
        %s235 = scalar_lea.vmem %s0, %s234
      $region40: #{resonance_forward.1} parent=35 // pred_fallthru
        _
      // Predicated region
      $region41: #{resonance_forward.1} parent=35 // pred_check
        %p236 = pneg %p59
      $region42: #{resonance_forward.1} parent=35 // pred_check_branch
        %238 = sbr.rel (%p236) target = $region44
      $region43: #{resonance_forward.1} parent=35 // pred_region
        %p239 = scmp.lt.s32.totalorder %s13, 1
        %s240 = scalar_select %p239, %s13, 1
        %s241 = smul.addr %s240, 8
        %s242 = scalar_lea.vmem %s1, %s241
      $region44: #{resonance_forward.1} parent=35 // pred_fallthru
        _
    $region36: #{resonance_forward.1} parent=5 // pred_fallthru
      _
    %p243 = scmp.le.s32.totalorder 1, %s13
    %p244 = scmp.lt.s32.totalorder %s13, 3
    %p245 = pnand %p243, %p244
    %p246 = pneg %p245
    // Predicated region
    $region45: #{resonance_forward.1} parent=5 // pred_check
      _
    $region46: #{resonance_forward.1} parent=5 // pred_check_branch
      %248 = sbr.rel (%p245) target = $region48
    $region47: #{resonance_forward.1} parent=5 // pred_region
      %s249 = ssub.s32 %s13, 1
      %p250 = scmp.lt.s32.totalorder %s18, 1
      %s251 = scalar_select %p250, %s18, 1
      %s252 = scalar_lea.vmem %s0, %s251
      %p253 = pneg %p39
      %p254 = pneg %p36
      %p255 = scmp.lt.s32.totalorder %s18, 1
      %s256 = scalar_select %p255, %s18, 1
      %s257 = smul.addr %s256, 8
      %s258 = scalar_lea.vmem %s1, %s257
      %p259 = pneg %p65
      %p260 = pneg %p62
      %p261 = pneg %p86
      %p262 = pneg %p83
      %p263 = pneg %p107
      %p264 = pneg %p104
      %p265 = pneg %p128
      %p266 = pneg %p125
      %p267 = pneg %p149
      %p268 = pneg %p146
      %p269 = pneg %p170
      %p270 = pneg %p167
      %p271 = pneg %p196
      %p272 = pneg %p193
      %p273 = scmp.lt.s32.totalorder %s18, 1
      %s274 = scalar_select %p273, %s18, 1
      %s275 = smul.addr %s274, 8
      %s276 = scalar_lea.vmem %s7, %s275
      %p277 = scmp.lt.s32.totalorder %s18, 1
      %s278 = scalar_select %p277, %s18, 1
      %s279 = scalar_lea.vmem %s0, %s278
      %p280 = scmp.lt.s32.totalorder %s18, 1
      %s281 = scalar_select %p280, %s18, 1
      %s282 = smul.addr %s281, 8
      %s283 = scalar_lea.vmem %s1, %s282
      %p284 = scmp.lt.s32.totalorder %s18, 1
      %s285 = scalar_select %p284, %s18, 1
      %s286 = smul.addr %s285, 8
      %s287 = scalar_lea.vmem %s7, %s286
      %v289 = vld [vmem:[%s3] sm:$0xff]
      %v290 = vld [vmem:[%s2] sm:$0xff]
      %v291 = vld [vmem:[%s2 + $0x8] sm:$0xff]
      %v292 = vld [vmem:[%s283] sm:$0xff]
      %v293 = vlaneseq
      %v294 = vand.u32 %v293, 127
      %vm295 = vcmp.lt.s32.totalorder %v294, 0
      %v296 = vsub.s32 0, %v294
      %v297 = vsel %vm295, %v296, %v294
      %v298 = vshrl.u32 %v297, 1
      %v299 = vand.u32 %v297, 1
      %v300 = vsub.s32 0, %v299
      %v301 = vsel %vm295, %v300, %v299
      %vm302 = vcmp.ne.s32.totalorder %v301, 0
      %vm303 = vcmp.lt.s32.totalorder %v301, 0
      %vm304 = vmand %vm303, %vm302
      %v305 = vadd.s32 %v301, 2
      %v306 = vsel %vm304, %v305, %v301
      %vm307 = vcmp.eq.s32.totalorder %v306, 0
      %309 = vset.pattern.permute.xlu0 14
      %310 = vperm.xlu0 %309, %v292
      %v311 = vpop.permute.xlu0 %310
      %313 = vset.pattern.permute.xlu0 15
      %314 = vperm.xlu0 %313, %v292
      %v315 = vpop.permute.xlu0 %314
      %v317 = vsel %vm307, %v311, %v315
      %v318 = vsub.f32 %v292, %v317
      %v319 = vpack.c.bf16 %v318, %v318
      %v321 = vperm.slane %v289, 0
      %v322 = vperm.slane %v289, 4
      %v325 = vperm.slane %v321, 0
      %v326 = vperm.slane %v322, 0
      %v329 = vunpack.c.l.b16 %v290
      %v330 = vunpack.c.h.b16 %v290
      %v331 = vunpack.c.l.b16 %v291
      %v332 = vunpack.c.h.b16 %v291
      %v333 = vpack.c.b16 %v331, %v329
      %v334 = vpack.c.b16 %v332, %v330
      %vm337 = vcmask 130048
      %v339 = vsel %vm337, %v319, 0
      %341 = vmatpush.bf16.msra.mxu0 0
      %342 = vmatpush.bf16.msra.mxu0 0
      %343 = vmatpush.bf16.msra.mxu0 0
      %344 = vmatpush.bf16.msra.mxu0 0
      %345 = vmatpush.bf16.msra.mxu0 0
      %346 = vmatpush.bf16.msra.mxu0 0
      %347 = vmatpush.bf16.msra.mxu0 0
      %348 = vmatpush.bf16.msra.mxu0 %v333
      %349 = vmatmul.bf16.gmra.mxu0 %v339
      %v350 = vpop.f32.mrf.mxu0
      %v351 = vadd.f32 %v325, %v350
      %v352 = vpop.f32.mrf.mxu0
      %353 = vdwg.mxu0
      %354 = vmatpush.bf16.msra.mxu0 0
      %355 = vmatpush.bf16.msra.mxu0 0
      %356 = vmatpush.bf16.msra.mxu0 0
      %357 = vmatpush.bf16.msra.mxu0 0
      %358 = vmatpush.bf16.msra.mxu0 0
      %359 = vmatpush.bf16.msra.mxu0 0
      %360 = vmatpush.bf16.msra.mxu0 0
      %361 = vmatpush.bf16.msra.mxu0 %v334
      %362 = vmatmul.bf16.gmra.mxu0 %v339
      %v363 = vpop.f32.mrf.mxu0
      %v364 = vadd.f32 %v326, %v363
      %v365 = vpop.f32.mrf.mxu0
      %366 = vdwg.mxu0
      %v367 = vmax.f32 %v351, 0.0
      %v368 = vmax.f32 %v364, 0.0
      %v369 = vld [vmem:[%s279] sm:$0x1]
      %371 = vset.pattern.permute.xlu0 14
      %372 = vperm.xlu0 %371, %v369
      %v373 = vpop.permute.xlu0 %372
      %v375 = vperm.slane %v373, 0
      %376 = vset.pattern.permute.xlu0 15
      %377 = vperm.xlu0 %376, %v369
      %v378 = vpop.permute.xlu0 %377
      %v380 = vperm.slane %v378, 0
      %v381 = vsel %vm307, %v375, %v380
      %v382 = vsub.f32 %v369, %v381
      %v383 = vpack.c.bf16 %v382, %v382
      %v385 = vsel %vm337, %v383, 0
      %387 = vmatpush.bf16.msra.mxu0 0
      %388 = vmatpush.bf16.msra.mxu0 0
      %389 = vmatpush.bf16.msra.mxu0 0
      %390 = vmatpush.bf16.msra.mxu0 0
      %391 = vmatpush.bf16.msra.mxu0 0
      %392 = vmatpush.bf16.msra.mxu0 0
      %393 = vmatpush.bf16.msra.mxu0 0
      %394 = vmatpush.bf16.msra.mxu0 %v333
      %395 = vmatmul.bf16.gmra.mxu0 %v385
      %v396 = vpop.f32.mrf.mxu0
      %v397 = vadd.f32 %v321, %v396
      %v398 = vpop.f32.mrf.mxu0
      %399 = vdwg.mxu0
      %400 = vmatpush.bf16.msra.mxu0 0
      %401 = vmatpush.bf16.msra.mxu0 0
      %402 = vmatpush.bf16.msra.mxu0 0
      %403 = vmatpush.bf16.msra.mxu0 0
      %404 = vmatpush.bf16.msra.mxu0 0
      %405 = vmatpush.bf16.msra.mxu0 0
      %406 = vmatpush.bf16.msra.mxu0 0
      %407 = vmatpush.bf16.msra.mxu0 %v334
      %408 = vmatmul.bf16.gmra.mxu0 %v385
      %v409 = vpop.f32.mrf.mxu0
      %v410 = vadd.f32 %v322, %v409
      %v411 = vpop.f32.mrf.mxu0
      %412 = vdwg.mxu0
      %v413 = vmax.f32 %v397, 0.0
      %v414 = vmax.f32 %v410, 0.0
      %v415 = vperm.slane %v413, 0
      %v416 = vperm.slane %v414, 0
      %v417 = vmul.f32 %v415, %v367
      %v418 = vmul.f32 %v416, %v368
      %v419 = vpack.c.bf16 %v417, %v417
      %v420 = vpack.c.bf16 %v418, %v418
      %v421 = vld [vmem:[%s4] sm:$0xf]
      %v422 = vld [vmem:[%s4 + $0x4] sm:$0xf]
      %v423 = vld [vmem:[%s4 + $0x8] sm:$0xf]
      %v424 = vld [vmem:[%s4 + $0xc] sm:$0xf]
      %v425 = vld [vmem:[%s4 + $0x10] sm:$0xf]
      %v426 = vld [vmem:[%s4 + $0x14] sm:$0xf]
      %v427 = vld [vmem:[%s4 + $0x18] sm:$0xf]
      %v428 = vld [vmem:[%s4 + $0x1c] sm:$0xf]
      %v429 = vld [vmem:[%s4 + $0x20] sm:$0xf]
      %v430 = vld [vmem:[%s4 + $0x24] sm:$0xf]
      %v431 = vld [vmem:[%s4 + $0x28] sm:$0xf]
      %v432 = vld [vmem:[%s4 + $0x2c] sm:$0xf]
      %v433 = vld [vmem:[%s4 + $0x30] sm:$0xf]
      %v434 = vld [vmem:[%s4 + $0x34] sm:$0xf]
      %v435 = vld [vmem:[%s4 + $0x38] sm:$0xf]
      %v436 = vld [vmem:[%s4 + $0x3c] sm:$0xf]
      %v437 = vld [vmem:[%s4 + $0x40] sm:$0xf]
      %v438 = vld [vmem:[%s4 + $0x44] sm:$0xf]
      %v439 = vld [vmem:[%s4 + $0x48] sm:$0xf]
      %v440 = vld [vmem:[%s4 + $0x4c] sm:$0xf]
      %v441 = vld [vmem:[%s4 + $0x50] sm:$0xf]
      %v442 = vld [vmem:[%s4 + $0x54] sm:$0xf]
      %v443 = vld [vmem:[%s4 + $0x58] sm:$0xf]
      %v444 = vld [vmem:[%s4 + $0x5c] sm:$0xf]
      %v445 = vld [vmem:[%s4 + $0x60] sm:$0xf]
      %v446 = vld [vmem:[%s4 + $0x64] sm:$0xf]
      %v447 = vld [vmem:[%s4 + $0x68] sm:$0xf]
      %v448 = vld [vmem:[%s4 + $0x6c] sm:$0xf]
      %v449 = vld [vmem:[%s4 + $0x70] sm:$0xf]
      %v450 = vld [vmem:[%s4 + $0x74] sm:$0xf]
      %v451 = vld [vmem:[%s4 + $0x78] sm:$0xf]
      %v452 = vld [vmem:[%s4 + $0x7c] sm:$0xf]
      %v453 = vperm.slane %v289, 1
      %v486 = vunpack.c.l.b16 %v421
      %v487 = vunpack.c.l.b16 %v422
      %v488 = vunpack.c.l.b16 %v423
      %v489 = vunpack.c.l.b16 %v424
      %v490 = vunpack.c.l.b16 %v425
      %v491 = vunpack.c.l.b16 %v426
      %v492 = vunpack.c.l.b16 %v427
      %v493 = vunpack.c.l.b16 %v428
      %v494 = vunpack.c.l.b16 %v429
      %v495 = vunpack.c.l.b16 %v430
      %v496 = vunpack.c.l.b16 %v431
      %v497 = vunpack.c.l.b16 %v432
      %v498 = vunpack.c.l.b16 %v433
      %v499 = vunpack.c.l.b16 %v434
      %v500 = vunpack.c.l.b16 %v435
      %v501 = vunpack.c.l.b16 %v436
      %v502 = vunpack.c.l.b16 %v437
      %v503 = vunpack.c.l.b16 %v438
      %v504 = vunpack.c.l.b16 %v439
      %v505 = vunpack.c.l.b16 %v440
      %v506 = vunpack.c.l.b16 %v441
      %v507 = vunpack.c.l.b16 %v442
      %v508 = vunpack.c.l.b16 %v443
      %v509 = vunpack.c.l.b16 %v444
      %v510 = vunpack.c.l.b16 %v445
      %v511 = vunpack.c.l.b16 %v446
      %v512 = vunpack.c.l.b16 %v447
      %v513 = vunpack.c.l.b16 %v448
      %v514 = vunpack.c.l.b16 %v449
      %v515 = vunpack.c.l.b16 %v450
      %v516 = vunpack.c.l.b16 %v451
      %v517 = vunpack.c.l.b16 %v452
      %v518 = vpack.c.b16 %v487, %v486
      %v519 = vpack.c.b16 %v489, %v488
      %v520 = vpack.c.b16 %v491, %v490
      %v521 = vpack.c.b16 %v493, %v492
      %v522 = vpack.c.b16 %v495, %v494
      %v523 = vpack.c.b16 %v497, %v496
      %v524 = vpack.c.b16 %v499, %v498
      %v525 = vpack.c.b16 %v501, %v500
      %v526 = vpack.c.b16 %v503, %v502
      %v527 = vpack.c.b16 %v505, %v504
      %v528 = vpack.c.b16 %v507, %v506
      %v529 = vpack.c.b16 %v509, %v508
      %v530 = vpack.c.b16 %v511, %v510
      %v531 = vpack.c.b16 %v513, %v512
      %v532 = vpack.c.b16 %v515, %v514
      %v533 = vpack.c.b16 %v517, %v516
      %550 = vmatpush.bf16.msra.mxu0 %v525
      %551 = vmatpush.bf16.msra.mxu0 %v524
      %552 = vmatpush.bf16.msra.mxu0 %v523
      %553 = vmatpush.bf16.msra.mxu0 %v522
      %554 = vmatpush.bf16.msra.mxu0 %v521
      %555 = vmatpush.bf16.msra.mxu0 %v520
      %556 = vmatpush.bf16.msra.mxu0 %v519
      %557 = vmatpush.bf16.msra.mxu0 %v518
      %558 = vmatmul.bf16.gmra.mxu0 %v419
      %v559 = vpop.f32.mrf.mxu0
      %v560 = vadd.f32 %v453, %v559
      %v561 = vpop.f32.mrf.mxu0
      %562 = vdwg.mxu0
      %563 = vmatpush.bf16.msra.mxu0 %v533
      %564 = vmatpush.bf16.msra.mxu0 %v532
      %565 = vmatpush.bf16.msra.mxu0 %v531
      %566 = vmatpush.bf16.msra.mxu0 %v530
      %567 = vmatpush.bf16.msra.mxu0 %v529
      %568 = vmatpush.bf16.msra.mxu0 %v528
      %569 = vmatpush.bf16.msra.mxu0 %v527
      %570 = vmatpush.bf16.msra.mxu0 %v526
      %571 = vmatmul.bf16.gmra.mxu0 %v420
      %v572 = vpop.f32.mrf.mxu0
      %v573 = vadd.f32 %v560, %v572
      %v574 = vpop.f32.mrf.mxu0
      %575 = vdwg.mxu0
      %v576 = vmax.f32 %v573, 0.0
      %v577 = vpack.c.bf16 %v576, %v576
      %v578 = vld [vmem:[%s5] sm:$0xf]
      %v579 = vld [vmem:[%s5 + $0x4] sm:$0xf]
      %v580 = vld [vmem:[%s5 + $0x8] sm:$0xf]
      %v581 = vld [vmem:[%s5 + $0xc] sm:$0xf]
      %v582 = vperm.slane %v289, 2
      %v587 = vunpack.c.l.b16 %v578
      %v588 = vunpack.c.l.b16 %v579
      %v589 = vunpack.c.l.b16 %v580
      %v590 = vunpack.c.l.b16 %v581
      %v591 = vpack.c.b16 %v588, %v587
      %v592 = vpack.c.b16 %v590, %v589
      %vm595 = vcmask 261120
      %v597 = vsel %vm595, %v577, 0
      %599 = vmatpush.bf16.msra.mxu0 0
      %600 = vmatpush.bf16.msra.mxu0 0
      %601 = vmatpush.bf16.msra.mxu0 0
      %602 = vmatpush.bf16.msra.mxu0 0
      %603 = vmatpush.bf16.msra.mxu0 0
      %604 = vmatpush.bf16.msra.mxu0 0
      %605 = vmatpush.bf16.msra.mxu0 %v592
      %606 = vmatpush.bf16.msra.mxu0 %v591
      %607 = vmatmul.bf16.gmra.mxu0 %v597
      %v608 = vpop.f32.mrf.mxu0
      %v609 = vadd.f32 %v582, %v608
      %v610 = vpop.f32.mrf.mxu0
      %611 = vdwg.mxu0
      %v612 = vmax.f32 %v609, 0.0
      %v613 = vpack.c.bf16 %v612, %v612
      %v614 = vld [vmem:[%s6] sm:$0xf]
      %v615 = vld [vmem:[%s6 + $0x4] sm:$0xf]
      %v616 = vld [vmem:[%s6 + $0x8] sm:$0xf]
      %v617 = vld [vmem:[%s6 + $0xc] sm:$0xf]
      %v618 = vperm.slane %v289, 3
      %v623 = vunpack.c.l.b16 %v614
      %v624 = vunpack.c.l.b16 %v615
      %v625 = vunpack.c.l.b16 %v616
      %v626 = vunpack.c.l.b16 %v617
      %v627 = vpack.c.b16 %v624, %v623
      %v628 = vpack.c.b16 %v626, %v625
      %v632 = vsel %vm595, %v613, 0
      %634 = vmatpush.bf16.msra.mxu0 0
      %635 = vmatpush.bf16.msra.mxu0 0
      %636 = vmatpush.bf16.msra.mxu0 0
      %637 = vmatpush.bf16.msra.mxu0 0
      %638 = vmatpush.bf16.msra.mxu0 0
      %639 = vmatpush.bf16.msra.mxu0 0
      %640 = vmatpush.bf16.msra.mxu0 %v628
      %641 = vmatpush.bf16.msra.mxu0 %v627
      %642 = vmatmul.bf16.gmra.mxu0 %v632
      %v643 = vpop.f32.mrf.mxu0
      %v644 = vadd.f32 %v618, %v643
      %v645 = vpop.f32.mrf.mxu0
      %646 = vdwg.mxu0
      %v647 = vmax.f32 %v644, 0.0
      %648 = vst.msk [vmem:[%s287] sm:$0xff] %vm337, %v647
      %p649 = scmp.lt.s32.totalorder %s18, 1
      %s650 = scalar_select %p649, %s18, 1
      %s651 = smul.addr %s650, 8
      %s652 = scalar_lea.vmem %s7, %s651
      // Predicated region
      $region49: #{resonance_forward.1} parent=47 // pred_check
        %p653 = pneg %p193
      $region50: #{resonance_forward.1} parent=47 // pred_check_branch
        %655 = sbr.rel (%p653) target = $region52
      $region51: #{resonance_forward.1} parent=47 // pred_region
        _
      $region52: #{resonance_forward.1} parent=47 // pred_fallthru
        _
    $region48: #{resonance_forward.1} parent=5 // pred_fallthru
      _
    %p656 = scmp.le.s32.totalorder 2, %s13
    // Predicated region
    $region53: #{resonance_forward.1} parent=5 // pred_check
      %p657 = pneg %p656
    $region54: #{resonance_forward.1} parent=5 // pred_check_branch
      %659 = sbr.rel (%p657) target = $region56
    $region55: #{resonance_forward.1} parent=5 // pred_region
      %s660 = ssub.s32 %s13, 2
      // Predicated region
      $region57: #{resonance_forward.1} parent=55 // pred_check
        %p661 = pneg %p199
      $region58: #{resonance_forward.1} parent=55 // pred_check_branch
        %663 = sbr.rel (%p661) target = $region60
      $region59: #{resonance_forward.1} parent=55 // pred_region
        %p664 = scmp.lt.s32.totalorder %s19, 1
        %s665 = scalar_select %p664, %s19, 1
        %s666 = smul.addr %s665, 8
        %s667 = scalar_lea.vmem %s7, %s666
      $region60: #{resonance_forward.1} parent=55 // pred_fallthru
        _
    $region56: #{resonance_forward.1} parent=5 // pred_fallthru
      _
  $region6: #{resonance_forward.1} parent=0 // loop_footer
    %s17 = sadd.s32 1, %s13
  $region7: #{resonance_forward.1} parent=0 // loop_footer_branch
    %12 = sbr.rel target = $region3
  $region8: #{resonance_forward.1} parent=0 // loop_exit
    _

</llo_original>
